<compile_context>
chip_gen: v6e
topology: v6e:2x2x1
jax: 0.10.0
libtpu: 0.0.40
codegen_flags: <defaults>
</compile_context>

<pallas_src>
import jax
import jax.numpy as jnp
import numpy as np
from jax.experimental import pallas as pl
from jax.experimental.pallas import tpu as pltpu

H_DIM = 18          # h_dim from the module
VOCAB_SIZE = 64     # synthetic stand-in for max(tokenizer.vocab.values()) + 2


def encoding_kernel(ids_ref, pos_ref, emb_ref, out_ref):
    """One-hot MXU gather + fused positional add for one block of batch rows.

    ids_ref : VMEM (RB, S, 1) int32  -- token ids for RB sequences
    pos_ref : VMEM (1, S, H) f32     -- positional table (same block every step)
    emb_ref : VMEM (V, H) f32        -- full embedding table (resident across steps)
    out_ref : VMEM (RB, S, H) f32    -- logical-width output block
    """
    rb, s, _ = ids_ref.shape
    v, h = emb_ref.shape

    ids = ids_ref[...]                                            # (RB, S, 1) int32
    iota = jax.lax.broadcasted_iota(jnp.int32, (rb, s, v), 2)     # vocab index on lanes
    onehot = (ids == iota).astype(jnp.float32)                    # (RB, S, V)

    # Gather as a single MXU matmul; HIGHEST precision keeps the f32 table values
    # exact through the one-hot selection.
    gathered = jnp.dot(
        onehot.reshape(rb * s, v),
        emb_ref[...],
        preferred_element_type=jnp.float32,
        precision=jax.lax.Precision.HIGHEST,
    ).reshape(rb, s, h)                                           # (RB, S, H)

    # Fused positional add; pos block (1, S, H) broadcasts over the RB rows.
    out_ref[...] = gathered + pos_ref[...]


def encoding_forward(ids, emb_table, pos_table, *, block_rows=None):
    """ids: [B, S] int32 -> [B, S, H] float32 (embedding lookup + positional add)."""
    B, S = ids.shape
    V, H = emb_table.shape
    assert pos_table.shape == (S, H)

    if block_rows is None:
        # Largest divisor of B that keeps a block at <= ~2048 tokens
        # (bounds per-block VMEM while amortizing per-step overhead).
        block_rows = 1
        for rb in range(1, B + 1):
            if B % rb == 0 and rb * S <= 2048:
                block_rows = rb
    assert B % block_rows == 0, "block_rows must divide the batch size"

    ids3 = ids.astype(jnp.int32)[..., None]    # (B, S, 1): ids on sublanes for the kernel
    pos3 = pos_table[None]                     # (1, S, H)

    grid = (B // block_rows,)

    out = pl.pallas_call(
        encoding_kernel,
        out_shape=jax.ShapeDtypeStruct((B, S, H), jnp.float32),
        grid=grid,
        in_specs=[
            pl.BlockSpec((block_rows, S, 1), lambda b: (b, 0, 0)),   # ids block
            pl.BlockSpec((1, S, H), lambda b: (0, 0, 0)),            # pos (resident)
            pl.BlockSpec((V, H), lambda b: (0, 0)),                  # emb table (resident)
        ],
        out_specs=pl.BlockSpec((block_rows, S, H), lambda b: (b, 0, 0)),
        compiler_params=pltpu.CompilerParams(
            dimension_semantics=("parallel",)),
    )(ids3, pos3, emb_table)

    return out


def make_sinusoidal_pos_encoding(seq_len, h_dim):
    """Standard transformer sinusoidal positional encoding, shape (S, H)."""
    pos = np.arange(seq_len)[:, None].astype(np.float32)            # (S, 1)
    i = np.arange(h_dim)[None, :].astype(np.float32)                # (1, H)
    angle_rates = 1.0 / np.power(10000.0, (2.0 * np.floor(i / 2.0)) / h_dim)
    angles = pos * angle_rates                                      # (S, H)
    pe = np.zeros((seq_len, h_dim), dtype=np.float32)
    pe[:, 0::2] = np.sin(angles[:, 0::2])
    pe[:, 1::2] = np.cos(angles[:, 1::2])
    return jnp.asarray(pe)


if __name__ == "__main__":
    key = jax.random.PRNGKey(0)
    k_emb, k_ids = jax.random.split(key)

    B, S = 2, 8

    # Deterministic parameter init (nn.Embedding default ~ N(0,1)); zero the
    # padding_idx=0 row to match PyTorch forward semantics.
    emb_table = jax.random.normal(k_emb, (VOCAB_SIZE, H_DIM), dtype=jnp.float32)
    emb_table = emb_table.at[0].set(0.0)

    pos_table = make_sinusoidal_pos_encoding(S, H_DIM)

    ids = jax.random.randint(k_ids, (B, S), minval=0, maxval=VOCAB_SIZE,
                             dtype=jnp.int32)

    # block_rows=1 -> grid=(B,), exercising the tiled (multi-step) grid path even
    # at these tiny demo shapes; block_rows=None auto-sizes blocks at scale.
    out = encoding_forward(ids, emb_table, pos_table, block_rows=1)
    out = jax.block_until_ready(out)

    # Pure-JAX reference check (gather + add).
    ref = jnp.take(emb_table, ids, axis=0) + pos_table[None]
    np.testing.assert_allclose(np.asarray(out), np.asarray(ref),
                               rtol=1e-5, atol=1e-5)

    print("KERNEL_OK")
</pallas_src>

<mosaic_0001>
module attributes {stable_mosaic.version = 11 : i64} {
  func.func @encoding_kernel(%arg0: i32, %arg1: memref<1x8x1xi32, #tpu.memory_space<vmem>>, %arg2: memref<1x8x18xf32, #tpu.memory_space<vmem>>, %arg3: memref<64x18xf32, #tpu.memory_space<vmem>>, %arg4: memref<1x8x18xf32, #tpu.memory_space<vmem>>) attributes {dimension_semantics = [#tpu.dimension_semantics<parallel>], iteration_bounds = array<i64: 2>, scalar_prefetch = 0 : i64, scratch_operands = 0 : i64, tpu.core_type = #tpu.core_type<tc>, window_params = [{transform_indices = @transform_0, window_bounds = array<i64: 1, 8, 1>}, {pipeline_mode = #tpu.pipeline_mode<synchronous>, transform_indices = @transform_1, window_bounds = array<i64: 1, 8, 18>}, {pipeline_mode = #tpu.pipeline_mode<synchronous>, transform_indices = @transform_2, window_bounds = array<i64: 64, 18>}, {transform_indices = @transform_3, window_bounds = array<i64: 1, 8, 18>}]} {
    %c0 = arith.constant 0 : index
    %c0_0 = arith.constant 0 : index
    %c0_1 = arith.constant 0 : index
    %0 = vector.load %arg1[%c0, %c0_0, %c0_1] : memref<1x8x1xi32, #tpu.memory_space<vmem>>, vector<1x8x1xi32>
    %1 = tpu.iota {dimensions = array<i32: 2>} : vector<1x8x64xi32>
    %2 = vector.broadcast %0 : vector<1x8x1xi32> to vector<1x8x64xi32>
    %3 = arith.cmpi eq, %2, %1 : vector<1x8x64xi32>
    %4 = arith.extui %3 : vector<1x8x64xi1> to vector<1x8x64xi32>
    %5 = arith.sitofp %4 : vector<1x8x64xi32> to vector<1x8x64xf32>
    %6 = vector.shape_cast %5 : vector<1x8x64xf32> to vector<8x64xf32>
    %c0_2 = arith.constant 0 : index
    %c0_3 = arith.constant 0 : index
    %7 = vector.load %arg3[%c0_2, %c0_3] : memref<64x18xf32, #tpu.memory_space<vmem>>, vector<64x18xf32>
    %cst = arith.constant dense<0.000000e+00> : vector<8x18xf32>
    %8 = tpu.matmul %6, %7, %cst {dimension_numbers = #tpu.dot_dimension_numbers<[1], [0], [0], [1], [0, 0, 1, 1], [], []>, precision = #tpu.contract_precision<fp32>} : vector<8x64xf32>, vector<64x18xf32>, vector<8x18xf32> -> vector<8x18xf32>
    %9 = vector.shape_cast %8 : vector<8x18xf32> to vector<1x8x18xf32>
    %c0_4 = arith.constant 0 : index
    %c0_5 = arith.constant 0 : index
    %c0_6 = arith.constant 0 : index
    %10 = vector.load %arg2[%c0_4, %c0_5, %c0_6] : memref<1x8x18xf32, #tpu.memory_space<vmem>>, vector<1x8x18xf32>
    %11 = arith.addf %9, %10 : vector<1x8x18xf32>
    %c0_7 = arith.constant 0 : index
    %c0_8 = arith.constant 0 : index
    %c0_9 = arith.constant 0 : index
    %12 = vector.load %arg4[%c0_7, %c0_8, %c0_9] : memref<1x8x18xf32, #tpu.memory_space<vmem>>, vector<1x8x18xf32>
    tpu.vector_store %arg4[%c0_7, %c0_8, %c0_9], %11 {strides = array<i32>} : memref<1x8x18xf32, #tpu.memory_space<vmem>>, vector<1x8x18xf32>,
    return
  }
  func.func @transform_0(%arg0: i32) -> (i32, i32, i32) {
    %c0_i32 = arith.constant 0 : i32
    %c0_i32_0 = arith.constant 0 : i32
    %c0_i32_1 = arith.constant 0 : i32
    return %arg0, %c0_i32, %c0_i32_0 : i32, i32, i32
  }
  func.func @transform_1(%arg0: i32) -> (i32, i32, i32) {
    %c0_i32 = arith.constant 0 : i32
    %c0_i32_0 = arith.constant 0 : i32
    %c0_i32_1 = arith.constant 0 : i32
    %c0_i32_2 = arith.constant 0 : i32
    return %c0_i32, %c0_i32_0, %c0_i32_1 : i32, i32, i32
  }
  func.func @transform_2(%arg0: i32) -> (i32, i32) {
    %c0_i32 = arith.constant 0 : i32
    %c0_i32_0 = arith.constant 0 : i32
    %c0_i32_1 = arith.constant 0 : i32
    return %c0_i32, %c0_i32_0 : i32, i32
  }
  func.func @transform_3(%arg0: i32) -> (i32, i32, i32) {
    %c0_i32 = arith.constant 0 : i32
    %c0_i32_0 = arith.constant 0 : i32
    %c0_i32_1 = arith.constant 0 : i32
    return %arg0, %c0_i32, %c0_i32_0 : i32, i32, i32
  }
}

</mosaic_0001>

<llo_original>
// kernel: tpu_custom_call.1
$region0: #{tpu_custom_call.1}
  #allocation0 [shape = 'u32[]', space=smem, size = 0x4, offset = 0x4, fixed_abs, tag = 'smem constant byte address 0x4 - core index']
  #allocation1 [shape = 'u32[144,128]{1,0:T(1,128)}', space=vmem, size = 0x12000, scoped, tag = 'internal scratch']
  %s0 = inlined_call_operand.vmem [shape: s32[2,8,1], index: 0, kind: input, shape index: {}]
  %s1 = inlined_call_operand.vmem [shape: f32[1,8,18], index: 1, kind: input, shape index: {}]
  %s2 = inlined_call_operand.vmem [shape: f32[64,18], index: 2, kind: input, shape index: {}]
  %s3 = inlined_call_operand.hbm [shape: f32[2,8,18], index: 3, kind: output, shape index: {}]
  %s4 = sld [smem:[#allocation0]]
  $region45: #{tpu_custom_call.1} parent=0
    _
  %s6 = ssub.s32 1, %s4
  %s7 = scalar_select 0, %s6, %s4
  $region1: #{tpu_custom_call.1} parent=0
    #allocation2 [shape = 'u8[8192]{0}', space=vmem, size = 0x2000, scoped, tag = 'output window, operand 0']
    #allocation3 [shape = 's32[2]{0}', space=sflag, size = 0x8, scoped, tag = 'scoped memory for tpu_custom_call.1']
    %8 = vsyncpa [#allocation3], 0
    %s9 = scalar_lea.sflag [#allocation3], 1
    %10 = vsyncpa %s9, 0
    loop: start=0, step=1, limit=4
    $region2: #{tpu_custom_call.1} parent=1 // loop_pre_header
      _
    $region3: #{tpu_custom_call.1} parent=1 // loop_header
      %s12 = sphi 0, %s16
      %p13 = scmp.ge.s32.totalorder %s12, 4
      %s22 = sphi 0, %s24
      %s25 = sphi 0, %s22
      %s26 = sphi 0, %s25
      %s42 = sphi 0, %s26
      %s46 = sphi 0, %s46
      %s48 = sphi 0, %s46
      %s49 = sphi 0, %s48
      %s63 = sphi 0, %s49
      %s67 = sphi 0, %s67
      %s69 = sphi 0, %s67
      %s70 = sphi 0, %s69
      %s84 = sphi 0, %s70
      %s90 = sphi 0, %s92
      %s93 = sphi 0, %s90
      %s94 = sphi 0, %s93
      %s110 = sphi 0, %s94
    $region4: #{tpu_custom_call.1} parent=1 // loop_header_branch
      %15 = sbr.rel (%p13) target = $region8
    $region5: #{tpu_custom_call.1} parent=1 // loop_body
      %s17 = ssub.s32 %s12, 1
      %s18 = ssub.s32 %s12, 2
      %s19 = sadd.s32 %s12, 1
      %s20 = ssub.s32 %s12, %s19
      %p21 = scmp.eq.s32.totalorder %s20, 0
      %s23 = sadd.s32 %s22, 1
      %s24 = scalar_select %p21, %s22, %s23
      %p27 = pneg %p21
      %p28 = scmp.eq.s32.totalorder %s12, 1
      %p29 = por %p27, %p28
      %p30 = scmp.ne.s32.totalorder %s22, %s25
      %p31 = scmp.eq.s32.totalorder %s12, 0
      %p32 = por %p30, %p31
      %p33 = scmp.ne.s32.totalorder %s22, %s25
      %p34 = scmp.eq.s32.totalorder %s17, 1
      %p35 = por %p33, %p34
      %p36 = scmp.ne.s32.totalorder %s25, %s26
      %p37 = scmp.eq.s32.totalorder %s17, 0
      %p38 = por %p36, %p37
      %p39 = scmp.ne.s32.totalorder %s25, %s26
      %p40 = scmp.eq.s32.totalorder %s18, 1
      %p41 = por %p39, %p40
      %p43 = scmp.ne.s32.totalorder %s26, %s42
      %p44 = scmp.eq.s32.totalorder %s18, 0
      %p45 = por %p43, %p44
      %s47 = sadd.s32 %s46, 1
      %p50 = scmp.eq.s32.totalorder %s12, 1
      %p51 = scmp.ne.s32.totalorder %s46, %s48
      %p52 = scmp.eq.s32.totalorder %s12, 0
      %p53 = por %p51, %p52
      %p54 = scmp.ne.s32.totalorder %s46, %s48
      %p55 = scmp.eq.s32.totalorder %s17, 1
      %p56 = por %p54, %p55
      %p57 = scmp.ne.s32.totalorder %s48, %s49
      %p58 = scmp.eq.s32.totalorder %s17, 0
      %p59 = por %p57, %p58
      %p60 = scmp.ne.s32.totalorder %s48, %s49
      %p61 = scmp.eq.s32.totalorder %s18, 1
      %p62 = por %p60, %p61
      %p64 = scmp.ne.s32.totalorder %s49, %s63
      %p65 = scmp.eq.s32.totalorder %s18, 0
      %p66 = por %p64, %p65
      %s68 = sadd.s32 %s67, 1
      %p71 = scmp.eq.s32.totalorder %s12, 1
      %p72 = scmp.ne.s32.totalorder %s67, %s69
      %p73 = scmp.eq.s32.totalorder %s12, 0
      %p74 = por %p72, %p73
      %p75 = scmp.ne.s32.totalorder %s67, %s69
      %p76 = scmp.eq.s32.totalorder %s17, 1
      %p77 = por %p75, %p76
      %p78 = scmp.ne.s32.totalorder %s69, %s70
      %p79 = scmp.eq.s32.totalorder %s17, 0
      %p80 = por %p78, %p79
      %p81 = scmp.ne.s32.totalorder %s69, %s70
      %p82 = scmp.eq.s32.totalorder %s18, 1
      %p83 = por %p81, %p82
      %p85 = scmp.ne.s32.totalorder %s70, %s84
      %p86 = scmp.eq.s32.totalorder %s18, 0
      %p87 = por %p85, %p86
      %s88 = ssub.s32 %s12, %s19
      %p89 = scmp.eq.s32.totalorder %s88, 0
      %s91 = sadd.s32 %s90, 1
      %s92 = scalar_select %p89, %s90, %s91
      %p95 = pneg %p89
      %p96 = scmp.eq.s32.totalorder %s12, 1
      %p97 = por %p95, %p96
      %p98 = scmp.ne.s32.totalorder %s90, %s93
      %p99 = scmp.eq.s32.totalorder %s12, 0
      %p100 = por %p98, %p99
      %p101 = scmp.ne.s32.totalorder %s90, %s93
      %p102 = scmp.eq.s32.totalorder %s17, 1
      %p103 = por %p101, %p102
      %p104 = scmp.ne.s32.totalorder %s93, %s94
      %p105 = scmp.eq.s32.totalorder %s17, 0
      %p106 = por %p104, %p105
      %p107 = scmp.ne.s32.totalorder %s93, %s94
      %p108 = scmp.eq.s32.totalorder %s18, 1
      %p109 = por %p107, %p108
      %p111 = scmp.ne.s32.totalorder %s94, %s110
      %p112 = scmp.eq.s32.totalorder %s18, 0
      %p113 = por %p111, %p112
      %p114 = scmp.le.s32.totalorder 1, %s12
      %p115 = scmp.lt.s32.totalorder %s12, 3
      %p116 = pnand %p114, %p115
      %p117 = pneg %p116
      // Predicated region
      $region9: #{tpu_custom_call.1} parent=5 // pred_check
        _
      $region10: #{tpu_custom_call.1} parent=5 // pred_check_branch
        %119 = sbr.rel (%p116) target = $region12
      $region11: #{tpu_custom_call.1} parent=5 // pred_region
        %s120 = ssub.s32 %s12, 1
        // Predicated region
        $region13: #{tpu_custom_call.1} parent=11 // pred_check
          %p121 = pneg %p59
        $region14: #{tpu_custom_call.1} parent=11 // pred_check_branch
          %123 = sbr.rel (%p121) target = $region16
        $region15: #{tpu_custom_call.1} parent=11 // pred_region
          _
        $region16: #{tpu_custom_call.1} parent=11 // pred_fallthru
          _
        // Predicated region
        $region17: #{tpu_custom_call.1} parent=11 // pred_check
          %p124 = pneg %p80
        $region18: #{tpu_custom_call.1} parent=11 // pred_check_branch
          %126 = sbr.rel (%p124) target = $region20
        $region19: #{tpu_custom_call.1} parent=11 // pred_region
          _
        $region20: #{tpu_custom_call.1} parent=11 // pred_fallthru
          _
      $region12: #{tpu_custom_call.1} parent=5 // pred_fallthru
        _
      %p127 = scmp.lt.s32.totalorder %s12, 2
      // Predicated region
      $region21: #{tpu_custom_call.1} parent=5 // pred_check
        %p128 = pneg %p127
      $region22: #{tpu_custom_call.1} parent=5 // pred_check_branch
        %130 = sbr.rel (%p128) target = $region24
      $region23: #{tpu_custom_call.1} parent=5 // pred_region
        // Predicated region
        $region25: #{tpu_custom_call.1} parent=23 // pred_check
          %p131 = pneg %p32
        $region26: #{tpu_custom_call.1} parent=23 // pred_check_branch
          %133 = sbr.rel (%p131) target = $region28
        $region27: #{tpu_custom_call.1} parent=23 // pred_region
          %p134 = scmp.lt.s32.totalorder %s12, 1
          %s135 = scalar_select %p134, %s12, 1
          %s136 = smul.addr %s135, 8
          %s137 = scalar_lea.vmem %s0, %s136
        $region28: #{tpu_custom_call.1} parent=23 // pred_fallthru
          _
      $region24: #{tpu_custom_call.1} parent=5 // pred_fallthru
        _
      %p138 = scmp.le.s32.totalorder 1, %s12
      %p139 = scmp.lt.s32.totalorder %s12, 3
      %p140 = pnand %p138, %p139
      %p141 = pneg %p140
      // Predicated region
      $region29: #{tpu_custom_call.1} parent=5 // pred_check
        _
      $region30: #{tpu_custom_call.1} parent=5 // pred_check_branch
        %143 = sbr.rel (%p140) target = $region32
      $region31: #{tpu_custom_call.1} parent=5 // pred_region
        %s144 = ssub.s32 %s12, 1
        %p145 = scmp.lt.s32.totalorder %s17, 1
        %s146 = scalar_select %p145, %s17, 1
        %s147 = smul.addr %s146, 8
        %s148 = scalar_lea.vmem %s0, %s147
        %p149 = pneg %p38
        %p150 = pneg %p35
        %p151 = pneg %p59
        %p152 = pneg %p56
        %p153 = pneg %p80
        %p154 = pneg %p77
        %p155 = pneg %p106
        %p156 = pneg %p103
        %s157 = sand.u32 %s93, 1
        %s158 = scalar_lea.sflag [#allocation3], %s157
        %s159 = sand.u32 %s93, 1
        %s160 = smul.addr %s159, 8
        %s161 = scalar_lea.vmem [#allocation2], %s160
        %p162 = scmp.lt.s32.totalorder %s17, 1
        %s163 = scalar_select %p162, %s17, 1
        %s164 = smul.addr %s163, 8
        %s165 = scalar_lea.vmem %s0, %s164
        %v166 = vld [vmem:[%s165] sm:$0xff]
        %v167 = vlaneseq
        %v168 = vand.u32 %v167, 127
        %169 = vset.pattern.permute.xlu0 0
        %170 = vperm.xlu0 %169, %v166
        %v171 = vpop.permute.xlu0 %170
        %vm172 = vcmp.eq.s32.totalorder %v171, %v168
        %v173 = vsel %vm172, 1, 0
        %v174 = vcvt.s32.f32 %v173
        %v175 = vld [vmem:[%s2] sm:$0xff]
        %v176 = vld [vmem:[%s2 + $0x8] sm:$0xff]
        %v177 = vld [vmem:[%s2 + $0x10] sm:$0xff]
        %v178 = vld [vmem:[%s2 + $0x18] sm:$0xff]
        %v179 = vld [vmem:[%s2 + $0x20] sm:$0xff]
        %v180 = vld [vmem:[%s2 + $0x28] sm:$0xff]
        %v181 = vld [vmem:[%s2 + $0x30] sm:$0xff]
        %v182 = vld [vmem:[%s2 + $0x38] sm:$0xff]
        %vm183 = vcmask 523264
        %v185 = vsel %vm183, %v174, 0
        %187 = vmatprep.subr.mxu0 0.0
        %188 = vmatpush1.msra.mxu0 0.0
        %189 = vmatprep.subr.mxu0 0.0
        %190 = vmatpush1.msra.mxu0 0.0
        %191 = vmatprep.subr.mxu0 0.0
        %192 = vmatpush1.msra.mxu0 0.0
        %193 = vmatprep.subr.mxu0 0.0
        %194 = vmatpush1.msra.mxu0 0.0
        %195 = vmatprep.subr.mxu0 0.0
        %196 = vmatpush1.msra.mxu0 0.0
        %197 = vmatprep.subr.mxu0 0.0
        %198 = vmatpush1.msra.mxu0 0.0
        %199 = vmatprep.subr.mxu0 0.0
        %200 = vmatpush1.msra.mxu0 0.0
        %201 = vmatprep.subr.mxu0 0.0
        %202 = vmatpush1.msra.mxu0 0.0
        %203 = vmatprep.subr.mxu0 0.0
        %v204 = vand.u32 %v182, 4294901760
        %205 = vmatpush1.msra.mxu0 %v204
        %206 = vmatprep.subr.mxu0 0.0
        %v207 = vand.u32 %v181, 4294901760
        %208 = vmatpush1.msra.mxu0 %v207
        %209 = vmatprep.subr.mxu0 0.0
        %v210 = vand.u32 %v180, 4294901760
        %211 = vmatpush1.msra.mxu0 %v210
        %212 = vmatprep.subr.mxu0 0.0
        %v213 = vand.u32 %v179, 4294901760
        %214 = vmatpush1.msra.mxu0 %v213
        %215 = vmatprep.subr.mxu0 0.0
        %v216 = vand.u32 %v178, 4294901760
        %217 = vmatpush1.msra.mxu0 %v216
        %218 = vmatprep.subr.mxu0 0.0
        %v219 = vand.u32 %v177, 4294901760
        %220 = vmatpush1.msra.mxu0 %v219
        %221 = vmatprep.subr.mxu0 0.0
        %v222 = vand.u32 %v176, 4294901760
        %223 = vmatpush1.msra.mxu0 %v222
        %224 = vmatprep.subr.mxu0 0.0
        %v225 = vand.u32 %v175, 4294901760
        %226 = vmatpush1.msra.mxu0 %v225
        %227 = vmatprep.subr.mxu0 0.0
        %228 = vmatpush2.msra.mxu0 0.0
        %229 = vmatprep.subr.mxu0 0.0
        %230 = vmatpush2.msra.mxu0 0.0
        %231 = vmatprep.subr.mxu0 0.0
        %232 = vmatpush2.msra.mxu0 0.0
        %233 = vmatprep.subr.mxu0 0.0
        %234 = vmatpush2.msra.mxu0 0.0
        %235 = vmatprep.subr.mxu0 0.0
        %236 = vmatpush2.msra.mxu0 0.0
        %237 = vmatprep.subr.mxu0 0.0
        %238 = vmatpush2.msra.mxu0 0.0
        %239 = vmatprep.subr.mxu0 0.0
        %240 = vmatpush2.msra.mxu0 0.0
        %241 = vmatprep.subr.mxu0 0.0
        %242 = vmatpush2.msra.mxu0 0.0
        %243 = vmatprep.subr.mxu0 0.0
        %244 = vmatpush2.msra.mxu0 0.0
        %245 = vmatprep.subr.mxu0 0.0
        %246 = vmatpush2.msra.mxu0 0.0
        %247 = vmatprep.subr.mxu0 0.0
        %248 = vmatpush2.msra.mxu0 0.0
        %249 = vmatprep.subr.mxu0 0.0
        %250 = vmatpush2.msra.mxu0 0.0
        %251 = vmatprep.subr.mxu0 0.0
        %252 = vmatpush2.msra.mxu0 0.0
        %253 = vmatprep.subr.mxu0 0.0
        %254 = vmatpush2.msra.mxu0 0.0
        %255 = vmatprep.subr.mxu0 0.0
        %256 = vmatpush2.msra.mxu0 0.0
        %257 = vmatprep.subr.mxu0 0.0
        %258 = vmatpush2.msra.mxu0 0.0
        %259 = vmatprep.mubr.f32.mxu0 0.0
        %v260 = vand.u32 %v185, 4294901760
        %v261 = vsub.f32 %v185, %v260
        %v262 = vand.u32 %v261, 4294901760
        %v263 = vsub.f32 %v261, %v262
        %v264 = vand.u32 %v263, 4294901760
        %265 = vmatmul.mubr.f32.gmra.mxu0 %v264
        %v266 = vpop.f32.mrf.mxu0
        %v267 = vadd.f32 0.0, %v266
        %v268 = vpop.f32.mrf.mxu0
        %269 = vdwg.mxu0
        %270 = vmatprep.subr.mxu0 0.0
        %271 = vmatpush1.msra.mxu0 0.0
        %272 = vmatprep.subr.mxu0 0.0
        %273 = vmatpush1.msra.mxu0 0.0
        %274 = vmatprep.subr.mxu0 0.0
        %275 = vmatpush1.msra.mxu0 0.0
        %276 = vmatprep.subr.mxu0 0.0
        %277 = vmatpush1.msra.mxu0 0.0
        %278 = vmatprep.subr.mxu0 0.0
        %279 = vmatpush1.msra.mxu0 0.0
        %280 = vmatprep.subr.mxu0 0.0
        %281 = vmatpush1.msra.mxu0 0.0
        %282 = vmatprep.subr.mxu0 0.0
        %283 = vmatpush1.msra.mxu0 0.0
        %284 = vmatprep.subr.mxu0 0.0
        %285 = vmatpush1.msra.mxu0 0.0
        %286 = vmatprep.subr.mxu0 0.0
        %v287 = vand.u32 %v182, 4294901760
        %v288 = vsub.f32 %v182, %v287
        %v289 = vand.u32 %v288, 4294901760
        %v290 = vsub.f32 %v288, %v289
        %v291 = vand.u32 %v290, 4294901760
        %292 = vmatpush1.msra.mxu0 %v291
        %293 = vmatprep.subr.mxu0 0.0
        %v294 = vand.u32 %v181, 4294901760
        %v295 = vsub.f32 %v181, %v294
        %v296 = vand.u32 %v295, 4294901760
        %v297 = vsub.f32 %v295, %v296
        %v298 = vand.u32 %v297, 4294901760
        %299 = vmatpush1.msra.mxu0 %v298
        %300 = vmatprep.subr.mxu0 0.0
        %v301 = vand.u32 %v180, 4294901760
        %v302 = vsub.f32 %v180, %v301
        %v303 = vand.u32 %v302, 4294901760
        %v304 = vsub.f32 %v302, %v303
        %v305 = vand.u32 %v304, 4294901760
        %306 = vmatpush1.msra.mxu0 %v305
        %307 = vmatprep.subr.mxu0 0.0
        %v308 = vand.u32 %v179, 4294901760
        %v309 = vsub.f32 %v179, %v308
        %v310 = vand.u32 %v309, 4294901760
        %v311 = vsub.f32 %v309, %v310
        %v312 = vand.u32 %v311, 4294901760
        %313 = vmatpush1.msra.mxu0 %v312
        %314 = vmatprep.subr.mxu0 0.0
        %v315 = vand.u32 %v178, 4294901760
        %v316 = vsub.f32 %v178, %v315
        %v317 = vand.u32 %v316, 4294901760
        %v318 = vsub.f32 %v316, %v317
        %v319 = vand.u32 %v318, 4294901760
        %320 = vmatpush1.msra.mxu0 %v319
        %321 = vmatprep.subr.mxu0 0.0
        %v322 = vand.u32 %v177, 4294901760
        %v323 = vsub.f32 %v177, %v322
        %v324 = vand.u32 %v323, 4294901760
        %v325 = vsub.f32 %v323, %v324
        %v326 = vand.u32 %v325, 4294901760
        %327 = vmatpush1.msra.mxu0 %v326
        %328 = vmatprep.subr.mxu0 0.0
        %v329 = vand.u32 %v176, 4294901760
        %v330 = vsub.f32 %v176, %v329
        %v331 = vand.u32 %v330, 4294901760
        %v332 = vsub.f32 %v330, %v331
        %v333 = vand.u32 %v332, 4294901760
        %334 = vmatpush1.msra.mxu0 %v333
        %335 = vmatprep.subr.mxu0 0.0
        %v336 = vand.u32 %v175, 4294901760
        %v337 = vsub.f32 %v175, %v336
        %v338 = vand.u32 %v337, 4294901760
        %v339 = vsub.f32 %v337, %v338
        %v340 = vand.u32 %v339, 4294901760
        %341 = vmatpush1.msra.mxu0 %v340
        %342 = vmatprep.subr.mxu0 0.0
        %343 = vmatpush2.msra.mxu0 0.0
        %344 = vmatprep.subr.mxu0 0.0
        %345 = vmatpush2.msra.mxu0 0.0
        %346 = vmatprep.subr.mxu0 0.0
        %347 = vmatpush2.msra.mxu0 0.0
        %348 = vmatprep.subr.mxu0 0.0
        %349 = vmatpush2.msra.mxu0 0.0
        %350 = vmatprep.subr.mxu0 0.0
        %351 = vmatpush2.msra.mxu0 0.0
        %352 = vmatprep.subr.mxu0 0.0
        %353 = vmatpush2.msra.mxu0 0.0
        %354 = vmatprep.subr.mxu0 0.0
        %355 = vmatpush2.msra.mxu0 0.0
        %356 = vmatprep.subr.mxu0 0.0
        %357 = vmatpush2.msra.mxu0 0.0
        %358 = vmatprep.subr.mxu0 0.0
        %359 = vmatpush2.msra.mxu0 0.0
        %360 = vmatprep.subr.mxu0 0.0
        %361 = vmatpush2.msra.mxu0 0.0
        %362 = vmatprep.subr.mxu0 0.0
        %363 = vmatpush2.msra.mxu0 0.0
        %364 = vmatprep.subr.mxu0 0.0
        %365 = vmatpush2.msra.mxu0 0.0
        %366 = vmatprep.subr.mxu0 0.0
        %367 = vmatpush2.msra.mxu0 0.0
        %368 = vmatprep.subr.mxu0 0.0
        %369 = vmatpush2.msra.mxu0 0.0
        %370 = vmatprep.subr.mxu0 0.0
        %371 = vmatpush2.msra.mxu0 0.0
        %372 = vmatprep.subr.mxu0 0.0
        %373 = vmatpush2.msra.mxu0 0.0
        %374 = vmatprep.mubr.f32.mxu0 0.0
        %v375 = vand.u32 %v185, 4294901760
        %376 = vmatmul.mubr.f32.gmra.mxu0 %v375
        %v377 = vpop.f32.mrf.mxu0
        %v378 = vadd.f32 %v267, %v377
        %v379 = vpop.f32.mrf.mxu0
        %380 = vdwg.mxu0
        %381 = vmatprep.subr.mxu0 0.0
        %382 = vmatpush1.msra.mxu0 0.0
        %383 = vmatprep.subr.mxu0 0.0
        %384 = vmatpush1.msra.mxu0 0.0
        %385 = vmatprep.subr.mxu0 0.0
        %386 = vmatpush1.msra.mxu0 0.0
        %387 = vmatprep.subr.mxu0 0.0
        %388 = vmatpush1.msra.mxu0 0.0
        %389 = vmatprep.subr.mxu0 0.0
        %390 = vmatpush1.msra.mxu0 0.0
        %391 = vmatprep.subr.mxu0 0.0
        %392 = vmatpush1.msra.mxu0 0.0
        %393 = vmatprep.subr.mxu0 0.0
        %394 = vmatpush1.msra.mxu0 0.0
        %395 = vmatprep.subr.mxu0 0.0
        %396 = vmatpush1.msra.mxu0 0.0
        %397 = vmatprep.subr.mxu0 0.0
        %v398 = vand.u32 %v182, 4294901760
        %v399 = vsub.f32 %v182, %v398
        %400 = vmatpush1.msra.mxu0 %v399
        %401 = vmatprep.subr.mxu0 0.0
        %v402 = vand.u32 %v181, 4294901760
        %v403 = vsub.f32 %v181, %v402
        %404 = vmatpush1.msra.mxu0 %v403
        %405 = vmatprep.subr.mxu0 0.0
        %v406 = vand.u32 %v180, 4294901760
        %v407 = vsub.f32 %v180, %v406
        %408 = vmatpush1.msra.mxu0 %v407
        %409 = vmatprep.subr.mxu0 0.0
        %v410 = vand.u32 %v179, 4294901760
        %v411 = vsub.f32 %v179, %v410
        %412 = vmatpush1.msra.mxu0 %v411
        %413 = vmatprep.subr.mxu0 0.0
        %v414 = vand.u32 %v178, 4294901760
        %v415 = vsub.f32 %v178, %v414
        %416 = vmatpush1.msra.mxu0 %v415
        %417 = vmatprep.subr.mxu0 0.0
        %v418 = vand.u32 %v177, 4294901760
        %v419 = vsub.f32 %v177, %v418
        %420 = vmatpush1.msra.mxu0 %v419
        %421 = vmatprep.subr.mxu0 0.0
        %v422 = vand.u32 %v176, 4294901760
        %v423 = vsub.f32 %v176, %v422
        %424 = vmatpush1.msra.mxu0 %v423
        %425 = vmatprep.subr.mxu0 0.0
        %v426 = vand.u32 %v175, 4294901760
        %v427 = vsub.f32 %v175, %v426
        %428 = vmatpush1.msra.mxu0 %v427
        %429 = vmatprep.subr.mxu0 0.0
        %430 = vmatpush2.msra.mxu0 0.0
        %431 = vmatprep.subr.mxu0 0.0
        %432 = vmatpush2.msra.mxu0 0.0
        %433 = vmatprep.subr.mxu0 0.0
        %434 = vmatpush2.msra.mxu0 0.0
        %435 = vmatprep.subr.mxu0 0.0
        %436 = vmatpush2.msra.mxu0 0.0
        %437 = vmatprep.subr.mxu0 0.0
        %438 = vmatpush2.msra.mxu0 0.0
        %439 = vmatprep.subr.mxu0 0.0
        %440 = vmatpush2.msra.mxu0 0.0
        %441 = vmatprep.subr.mxu0 0.0
        %442 = vmatpush2.msra.mxu0 0.0
        %443 = vmatprep.subr.mxu0 0.0
        %444 = vmatpush2.msra.mxu0 0.0
        %445 = vmatprep.subr.mxu0 0.0
        %446 = vmatpush2.msra.mxu0 0.0
        %447 = vmatprep.subr.mxu0 0.0
        %448 = vmatpush2.msra.mxu0 0.0
        %449 = vmatprep.subr.mxu0 0.0
        %450 = vmatpush2.msra.mxu0 0.0
        %451 = vmatprep.subr.mxu0 0.0
        %452 = vmatpush2.msra.mxu0 0.0
        %453 = vmatprep.subr.mxu0 0.0
        %454 = vmatpush2.msra.mxu0 0.0
        %455 = vmatprep.subr.mxu0 0.0
        %456 = vmatpush2.msra.mxu0 0.0
        %457 = vmatprep.subr.mxu0 0.0
        %458 = vmatpush2.msra.mxu0 0.0
        %459 = vmatprep.subr.mxu0 0.0
        %460 = vmatpush2.msra.mxu0 0.0
        %461 = vmatprep.mubr.f32.mxu0 0.0
        %v462 = vand.u32 %v185, 4294901760
        %v463 = vsub.f32 %v185, %v462
        %464 = vmatmul.mubr.f32.gmra.mxu0 %v463
        %v465 = vpop.f32.mrf.mxu0
        %v466 = vadd.f32 %v378, %v465
        %v467 = vpop.f32.mrf.mxu0
        %468 = vdwg.mxu0
        %469 = vmatprep.subr.mxu0 0.0
        %470 = vmatpush1.msra.mxu0 0.0
        %471 = vmatprep.subr.mxu0 0.0
        %472 = vmatpush1.msra.mxu0 0.0
        %473 = vmatprep.subr.mxu0 0.0
        %474 = vmatpush1.msra.mxu0 0.0
        %475 = vmatprep.subr.mxu0 0.0
        %476 = vmatpush1.msra.mxu0 0.0
        %477 = vmatprep.subr.mxu0 0.0
        %478 = vmatpush1.msra.mxu0 0.0
        %479 = vmatprep.subr.mxu0 0.0
        %480 = vmatpush1.msra.mxu0 0.0
        %481 = vmatprep.subr.mxu0 0.0
        %482 = vmatpush1.msra.mxu0 0.0
        %483 = vmatprep.subr.mxu0 0.0
        %484 = vmatpush1.msra.mxu0 0.0
        %485 = vmatprep.subr.mxu0 0.0
        %v486 = vand.u32 %v182, 4294901760
        %487 = vmatpush1.msra.mxu0 %v486
        %488 = vmatprep.subr.mxu0 0.0
        %v489 = vand.u32 %v181, 4294901760
        %490 = vmatpush1.msra.mxu0 %v489
        %491 = vmatprep.subr.mxu0 0.0
        %v492 = vand.u32 %v180, 4294901760
        %493 = vmatpush1.msra.mxu0 %v492
        %494 = vmatprep.subr.mxu0 0.0
        %v495 = vand.u32 %v179, 4294901760
        %496 = vmatpush1.msra.mxu0 %v495
        %497 = vmatprep.subr.mxu0 0.0
        %v498 = vand.u32 %v178, 4294901760
        %499 = vmatpush1.msra.mxu0 %v498
        %500 = vmatprep.subr.mxu0 0.0
        %v501 = vand.u32 %v177, 4294901760
        %502 = vmatpush1.msra.mxu0 %v501
        %503 = vmatprep.subr.mxu0 0.0
        %v504 = vand.u32 %v176, 4294901760
        %505 = vmatpush1.msra.mxu0 %v504
        %506 = vmatprep.subr.mxu0 0.0
        %v507 = vand.u32 %v175, 4294901760
        %508 = vmatpush1.msra.mxu0 %v507
        %509 = vmatprep.subr.mxu0 0.0
        %510 = vmatpush2.msra.mxu0 0.0
        %511 = vmatprep.subr.mxu0 0.0
        %512 = vmatpush2.msra.mxu0 0.0
        %513 = vmatprep.subr.mxu0 0.0
        %514 = vmatpush2.msra.mxu0 0.0
        %515 = vmatprep.subr.mxu0 0.0
        %516 = vmatpush2.msra.mxu0 0.0
        %517 = vmatprep.subr.mxu0 0.0
        %518 = vmatpush2.msra.mxu0 0.0
        %519 = vmatprep.subr.mxu0 0.0
        %520 = vmatpush2.msra.mxu0 0.0
        %521 = vmatprep.subr.mxu0 0.0
        %522 = vmatpush2.msra.mxu0 0.0
        %523 = vmatprep.subr.mxu0 0.0
        %524 = vmatpush2.msra.mxu0 0.0
        %525 = vmatprep.subr.mxu0 0.0
        %526 = vmatpush2.msra.mxu0 0.0
        %527 = vmatprep.subr.mxu0 0.0
        %528 = vmatpush2.msra.mxu0 0.0
        %529 = vmatprep.subr.mxu0 0.0
        %530 = vmatpush2.msra.mxu0 0.0
        %531 = vmatprep.subr.mxu0 0.0
        %532 = vmatpush2.msra.mxu0 0.0
        %533 = vmatprep.subr.mxu0 0.0
        %534 = vmatpush2.msra.mxu0 0.0
        %535 = vmatprep.subr.mxu0 0.0
        %536 = vmatpush2.msra.mxu0 0.0
        %537 = vmatprep.subr.mxu0 0.0
        %538 = vmatpush2.msra.mxu0 0.0
        %539 = vmatprep.subr.mxu0 0.0
        %540 = vmatpush2.msra.mxu0 0.0
        %541 = vmatprep.mubr.f32.mxu0 0.0
        %v542 = vand.u32 %v185, 4294901760
        %v543 = vsub.f32 %v185, %v542
        %v544 = vand.u32 %v543, 4294901760
        %545 = vmatmul.mubr.f32.gmra.mxu0 %v544
        %v546 = vpop.f32.mrf.mxu0
        %v547 = vadd.f32 %v466, %v546
        %v548 = vpop.f32.mrf.mxu0
        %549 = vdwg.mxu0
        %550 = vmatprep.subr.mxu0 0.0
        %551 = vmatpush1.msra.mxu0 0.0
        %552 = vmatprep.subr.mxu0 0.0
        %553 = vmatpush1.msra.mxu0 0.0
        %554 = vmatprep.subr.mxu0 0.0
        %555 = vmatpush1.msra.mxu0 0.0
        %556 = vmatprep.subr.mxu0 0.0
        %557 = vmatpush1.msra.mxu0 0.0
        %558 = vmatprep.subr.mxu0 0.0
        %559 = vmatpush1.msra.mxu0 0.0
        %560 = vmatprep.subr.mxu0 0.0
        %561 = vmatpush1.msra.mxu0 0.0
        %562 = vmatprep.subr.mxu0 0.0
        %563 = vmatpush1.msra.mxu0 0.0
        %564 = vmatprep.subr.mxu0 0.0
        %565 = vmatpush1.msra.mxu0 0.0
        %566 = vmatprep.subr.mxu0 0.0
        %v567 = vand.u32 %v182, 4294901760
        %v568 = vsub.f32 %v182, %v567
        %v569 = vand.u32 %v568, 4294901760
        %570 = vmatpush1.msra.mxu0 %v569
        %571 = vmatprep.subr.mxu0 0.0
        %v572 = vand.u32 %v181, 4294901760
        %v573 = vsub.f32 %v181, %v572
        %v574 = vand.u32 %v573, 4294901760
        %575 = vmatpush1.msra.mxu0 %v574
        %576 = vmatprep.subr.mxu0 0.0
        %v577 = vand.u32 %v180, 4294901760
        %v578 = vsub.f32 %v180, %v577
        %v579 = vand.u32 %v578, 4294901760
        %580 = vmatpush1.msra.mxu0 %v579
        %581 = vmatprep.subr.mxu0 0.0
        %v582 = vand.u32 %v179, 4294901760
        %v583 = vsub.f32 %v179, %v582
        %v584 = vand.u32 %v583, 4294901760
        %585 = vmatpush1.msra.mxu0 %v584
        %586 = vmatprep.subr.mxu0 0.0
        %v587 = vand.u32 %v178, 4294901760
        %v588 = vsub.f32 %v178, %v587
        %v589 = vand.u32 %v588, 4294901760
        %590 = vmatpush1.msra.mxu0 %v589
        %591 = vmatprep.subr.mxu0 0.0
        %v592 = vand.u32 %v177, 4294901760
        %v593 = vsub.f32 %v177, %v592
        %v594 = vand.u32 %v593, 4294901760
        %595 = vmatpush1.msra.mxu0 %v594
        %596 = vmatprep.subr.mxu0 0.0
        %v597 = vand.u32 %v176, 4294901760
        %v598 = vsub.f32 %v176, %v597
        %v599 = vand.u32 %v598, 4294901760
        %600 = vmatpush1.msra.mxu0 %v599
        %601 = vmatprep.subr.mxu0 0.0
        %v602 = vand.u32 %v175, 4294901760
        %v603 = vsub.f32 %v175, %v602
        %v604 = vand.u32 %v603, 4294901760
        %605 = vmatpush1.msra.mxu0 %v604
        %606 = vmatprep.subr.mxu0 0.0
        %607 = vmatpush2.msra.mxu0 0.0
        %608 = vmatprep.subr.mxu0 0.0
        %609 = vmatpush2.msra.mxu0 0.0
        %610 = vmatprep.subr.mxu0 0.0
        %611 = vmatpush2.msra.mxu0 0.0
        %612 = vmatprep.subr.mxu0 0.0
        %613 = vmatpush2.msra.mxu0 0.0
        %614 = vmatprep.subr.mxu0 0.0
        %615 = vmatpush2.msra.mxu0 0.0
        %616 = vmatprep.subr.mxu0 0.0
        %617 = vmatpush2.msra.mxu0 0.0
        %618 = vmatprep.subr.mxu0 0.0
        %619 = vmatpush2.msra.mxu0 0.0
        %620 = vmatprep.subr.mxu0 0.0
        %621 = vmatpush2.msra.mxu0 0.0
        %622 = vmatprep.subr.mxu0 0.0
        %623 = vmatpush2.msra.mxu0 0.0
        %624 = vmatprep.subr.mxu0 0.0
        %625 = vmatpush2.msra.mxu0 0.0
        %626 = vmatprep.subr.mxu0 0.0
        %627 = vmatpush2.msra.mxu0 0.0
        %628 = vmatprep.subr.mxu0 0.0
        %629 = vmatpush2.msra.mxu0 0.0
        %630 = vmatprep.subr.mxu0 0.0
        %631 = vmatpush2.msra.mxu0 0.0
        %632 = vmatprep.subr.mxu0 0.0
        %633 = vmatpush2.msra.mxu0 0.0
        %634 = vmatprep.subr.mxu0 0.0
        %635 = vmatpush2.msra.mxu0 0.0
        %636 = vmatprep.subr.mxu0 0.0
        %637 = vmatpush2.msra.mxu0 0.0
        %638 = vmatprep.mubr.f32.mxu0 0.0
        %v639 = vand.u32 %v185, 4294901760
        %640 = vmatmul.mubr.f32.gmra.mxu0 %v639
        %v641 = vpop.f32.mrf.mxu0
        %v642 = vadd.f32 %v547, %v641
        %v643 = vpop.f32.mrf.mxu0
        %644 = vdwg.mxu0
        %645 = vmatprep.subr.mxu0 0.0
        %646 = vmatpush1.msra.mxu0 0.0
        %647 = vmatprep.subr.mxu0 0.0
        %648 = vmatpush1.msra.mxu0 0.0
        %649 = vmatprep.subr.mxu0 0.0
        %650 = vmatpush1.msra.mxu0 0.0
        %651 = vmatprep.subr.mxu0 0.0
        %652 = vmatpush1.msra.mxu0 0.0
        %653 = vmatprep.subr.mxu0 0.0
        %654 = vmatpush1.msra.mxu0 0.0
        %655 = vmatprep.subr.mxu0 0.0
        %656 = vmatpush1.msra.mxu0 0.0
        %657 = vmatprep.subr.mxu0 0.0
        %658 = vmatpush1.msra.mxu0 0.0
        %659 = vmatprep.subr.mxu0 0.0
        %660 = vmatpush1.msra.mxu0 0.0
        %661 = vmatprep.subr.mxu0 0.0
        %v662 = vand.u32 %v182, 4294901760
        %663 = vmatpush1.msra.mxu0 %v662
        %664 = vmatprep.subr.mxu0 0.0
        %v665 = vand.u32 %v181, 4294901760
        %666 = vmatpush1.msra.mxu0 %v665
        %667 = vmatprep.subr.mxu0 0.0
        %v668 = vand.u32 %v180, 4294901760
        %669 = vmatpush1.msra.mxu0 %v668
        %670 = vmatprep.subr.mxu0 0.0
        %v671 = vand.u32 %v179, 4294901760
        %672 = vmatpush1.msra.mxu0 %v671
        %673 = vmatprep.subr.mxu0 0.0
        %v674 = vand.u32 %v178, 4294901760
        %675 = vmatpush1.msra.mxu0 %v674
        %676 = vmatprep.subr.mxu0 0.0
        %v677 = vand.u32 %v177, 4294901760
        %678 = vmatpush1.msra.mxu0 %v677
        %679 = vmatprep.subr.mxu0 0.0
        %v680 = vand.u32 %v176, 4294901760
        %681 = vmatpush1.msra.mxu0 %v680
        %682 = vmatprep.subr.mxu0 0.0
        %v683 = vand.u32 %v175, 4294901760
        %684 = vmatpush1.msra.mxu0 %v683
        %685 = vmatprep.subr.mxu0 0.0
        %686 = vmatpush2.msra.mxu0 0.0
        %687 = vmatprep.subr.mxu0 0.0
        %688 = vmatpush2.msra.mxu0 0.0
        %689 = vmatprep.subr.mxu0 0.0
        %690 = vmatpush2.msra.mxu0 0.0
        %691 = vmatprep.subr.mxu0 0.0
        %692 = vmatpush2.msra.mxu0 0.0
        %693 = vmatprep.subr.mxu0 0.0
        %694 = vmatpush2.msra.mxu0 0.0
        %695 = vmatprep.subr.mxu0 0.0
        %696 = vmatpush2.msra.mxu0 0.0
        %697 = vmatprep.subr.mxu0 0.0
        %698 = vmatpush2.msra.mxu0 0.0
        %699 = vmatprep.subr.mxu0 0.0
        %700 = vmatpush2.msra.mxu0 0.0
        %701 = vmatprep.subr.mxu0 0.0
        %702 = vmatpush2.msra.mxu0 0.0
        %703 = vmatprep.subr.mxu0 0.0
        %704 = vmatpush2.msra.mxu0 0.0
        %705 = vmatprep.subr.mxu0 0.0
        %706 = vmatpush2.msra.mxu0 0.0
        %707 = vmatprep.subr.mxu0 0.0
        %708 = vmatpush2.msra.mxu0 0.0
        %709 = vmatprep.subr.mxu0 0.0
        %710 = vmatpush2.msra.mxu0 0.0
        %711 = vmatprep.subr.mxu0 0.0
        %712 = vmatpush2.msra.mxu0 0.0
        %713 = vmatprep.subr.mxu0 0.0
        %714 = vmatpush2.msra.mxu0 0.0
        %715 = vmatprep.subr.mxu0 0.0
        %716 = vmatpush2.msra.mxu0 0.0
        %717 = vmatprep.mubr.f32.mxu0 0.0
        %v718 = vand.u32 %v185, 4294901760
        %719 = vmatmul.mubr.f32.gmra.mxu0 %v718
        %v720 = vpop.f32.mrf.mxu0
        %v721 = vadd.f32 %v642, %v720
        %v722 = vpop.f32.mrf.mxu0
        %723 = vdwg.mxu0
        %v724 = vld [vmem:[%s1] sm:$0xff]
        %v725 = vadd.f32 %v721, %v724
        %vm726 = vcmask 146432
        %727 = vst.msk [vmem:[%s161] sm:$0xff] %vm726, %v725
        %s728 = sand.u32 %s93, 1
        %s729 = scalar_lea.sflag [#allocation3], %s728
        %s730 = sand.u32 %s93, 1
        %s731 = smul.addr %s730, 8
        %s732 = scalar_lea.vmem [#allocation2], %s731
        // Predicated region
        $region33: #{tpu_custom_call.1} parent=31 // pred_check
          %p733 = pneg %p103
        $region34: #{tpu_custom_call.1} parent=31 // pred_check_branch
          %735 = sbr.rel (%p733) target = $region36
        $region35: #{tpu_custom_call.1} parent=31 // pred_region
          %s737 = ssub.s32 128, 128
          %738 = vsyncadd %s729, %s737
          %s739 = smul.addr %s17, 128
          %s740 = scalar_lea.hbm %s3, %s739
          %s742 = sshll.u32 %s732, 4
          %s743 = int_to_ptr.vmem [resolvable:$true] %s742
          %745 = dma.vmem_to_hbm [thread:$0]  %s743, 128, %s740, %s729
        $region36: #{tpu_custom_call.1} parent=31 // pred_fallthru
          _
      $region32: #{tpu_custom_call.1} parent=5 // pred_fallthru
        _
      %p746 = scmp.le.s32.totalorder 2, %s12
      // Predicated region
      $region37: #{tpu_custom_call.1} parent=5 // pred_check
        %p747 = pneg %p746
      $region38: #{tpu_custom_call.1} parent=5 // pred_check_branch
        %749 = sbr.rel (%p747) target = $region40
      $region39: #{tpu_custom_call.1} parent=5 // pred_region
        %s750 = ssub.s32 %s12, 2
        // Predicated region
        $region41: #{tpu_custom_call.1} parent=39 // pred_check
          %p751 = pneg %p109
        $region42: #{tpu_custom_call.1} parent=39 // pred_check_branch
          %753 = sbr.rel (%p751) target = $region44
        $region43: #{tpu_custom_call.1} parent=39 // pred_region
          %s754 = sand.u32 %s94, 1
          %s755 = scalar_lea.sflag [#allocation3], %s754
          %s756 = sand.u32 %s94, 1
          %s757 = smul.addr %s756, 8
          %s758 = scalar_lea.vmem [#allocation2], %s757
          %759 = dma.done %s755, 128
        $region44: #{tpu_custom_call.1} parent=39 // pred_fallthru
          _
      $region40: #{tpu_custom_call.1} parent=5 // pred_fallthru
        _
    $region6: #{tpu_custom_call.1} parent=1 // loop_footer
      %s16 = sadd.s32 1, %s12
    $region7: #{tpu_custom_call.1} parent=1 // loop_footer_branch
      %11 = sbr.rel target = $region3
    $region8: #{tpu_custom_call.1} parent=1 // loop_exit
      _
    %760 = vsyncpa [#allocation3], 1
    %s761 = scalar_lea.sflag [#allocation3], 1
    %762 = vsyncpa %s761, 1

</llo_original>
